<compile_context>
chip_gen: v7x
topology: tpu7x:2x2x1
jax: 0.10.0
libtpu: 0.0.40
codegen_flags: <defaults>
</compile_context>

<pallas_src>
import jax
import jax.numpy as jnp
from jax.experimental import pallas as pl
from jax.experimental.pallas import tpu as pltpu


def _round_up(x, m):
    return (x + m - 1) // m * m


def mlp_actor_kernel(x_ref, w1_ref, w23_ref, w4_ref, b123_ref, b4_ref, out_ref):
    # fc1 + tanh
    h = jnp.tanh(
        jnp.dot(x_ref[...], w1_ref[...], preferred_element_type=jnp.float32)
        + b123_ref[0])
    # fc2 + tanh
    h = jnp.tanh(
        jnp.dot(h, w23_ref[0], preferred_element_type=jnp.float32)
        + b123_ref[1])
    # fc3 + tanh
    h = jnp.tanh(
        jnp.dot(h, w23_ref[1], preferred_element_type=jnp.float32)
        + b123_ref[2])
    # fc4 + tanh (output lanes padded to a multiple of 128; padded cols stay 0)
    pi = jnp.tanh(
        jnp.dot(h, w4_ref[...], preferred_element_type=jnp.float32)
        + b4_ref[...])
    out_ref[...] = pi.astype(out_ref.dtype)


def mlp_actor_forward(x, params, *, tile_b=512):
    """x: (B, obs_dim) float32. params: dict of w1..w4 (in,out) and b1..b4 (1,out)."""
    B, obs_dim = x.shape
    hidden = params["w1"].shape[1]
    act_dim = params["w4"].shape[1]
    out_pad = _round_up(act_dim, 128)   # lane-dense output width

    # --- pack / pad parameters (cheap one-time XLA ops) ---------------------
    w1 = params["w1"]                                          # (obs_dim, hidden)
    w23 = jnp.stack([params["w2"], params["w3"]])              # (2, hidden, hidden)
    w4p = jnp.zeros((hidden, out_pad), jnp.float32).at[:, :act_dim].set(params["w4"])
    b123 = jnp.stack([params["b1"], params["b2"], params["b3"]])  # (3, 1, hidden)
    b4p = jnp.zeros((1, out_pad), jnp.float32).at[:, :act_dim].set(params["b4"])

    # --- batch tiling -------------------------------------------------------
    tb = _round_up(min(tile_b, _round_up(B, 8)), 8)   # multiple of 8 (f32 sublanes)
    B_pad = _round_up(B, tb)
    if B_pad != B:
        x = jnp.pad(x, ((0, B_pad - B), (0, 0)))
    grid = (B_pad // tb,)

    const2 = lambda i: (0, 0)
    const3 = lambda i: (0, 0, 0)

    out = pl.pallas_call(
        mlp_actor_kernel,
        out_shape=jax.ShapeDtypeStruct((B_pad, out_pad), jnp.float32),
        grid=grid,
        in_specs=[
            pl.BlockSpec((tb, obs_dim), lambda i: (i, 0)),      # x: tiled over batch
            pl.BlockSpec((obs_dim, hidden), const2),            # w1: resident
            pl.BlockSpec((2, hidden, hidden), const3),          # w2/w3: resident
            pl.BlockSpec((hidden, out_pad), const2),            # w4 (padded): resident
            pl.BlockSpec((3, 1, hidden), const3),               # b1/b2/b3: resident
            pl.BlockSpec((1, out_pad), const2),                 # b4 (padded): resident
        ],
        out_specs=pl.BlockSpec((tb, out_pad), lambda i: (i, 0)),
        compiler_params=pltpu.CompilerParams(
            dimension_semantics=("parallel",)),                 # megacore on v7x
    )(x, w1, w23, w4p, b123, b4p)

    # Slice in the wrapper (keeps the kernel's stores lane-dense).
    return out[:B, :act_dim]


def init_params(key, obs_dim, act_dim, hidden=64):
    """Deterministic synthetic init (uniform, roughly like torch default)."""
    dims = [(obs_dim, hidden), (hidden, hidden), (hidden, hidden), (hidden, act_dim)]
    params = {}
    keys = jax.random.split(key, 2 * len(dims))
    for i, (d_in, d_out) in enumerate(dims):
        bound = 1.0 / jnp.sqrt(d_in)
        params[f"w{i+1}"] = jax.random.uniform(
            keys[2 * i], (d_in, d_out), jnp.float32, -bound, bound)
        # biases kept 2D (1, d_out) so broadcast inside the kernel is lane-aligned
        params[f"b{i+1}"] = jax.random.uniform(
            keys[2 * i + 1], (1, d_out), jnp.float32, -bound, bound)
    return params


def reference_forward(x, params):
    h = jnp.tanh(x @ params["w1"] + params["b1"])
    h = jnp.tanh(h @ params["w2"] + params["b2"])
    h = jnp.tanh(h @ params["w3"] + params["b3"])
    return jnp.tanh(h @ params["w4"] + params["b4"])


if __name__ == "__main__":
    obs_dim, act_dim, batch = 16, 8, 20
    key = jax.random.PRNGKey(0)
    k_params, k_x = jax.random.split(key)

    params = init_params(k_params, obs_dim, act_dim)
    x = jax.random.normal(k_x, (batch, obs_dim), jnp.float32)

    # tile_b=8 keeps the demo small while exercising a multi-step grid
    # (batch 20 -> padded to 24 -> 3 grid steps) plus the output slice.
    pi = mlp_actor_forward(x, params, tile_b=8)
    pi = jax.block_until_ready(pi)

    ref = reference_forward(x, params)
    assert pi.shape == (batch, act_dim)
    assert jnp.allclose(pi, ref, atol=1e-5, rtol=1e-5)

    print("KERNEL_OK")
</pallas_src>

<mosaic_0001>
module attributes {stable_mosaic.version = 11 : i64} {
  func.func @mlp_actor_kernel(%arg0: i32, %arg1: memref<8x16xf32, #tpu.memory_space<vmem>>, %arg2: memref<16x64xf32, #tpu.memory_space<vmem>>, %arg3: memref<2x64x64xf32, #tpu.memory_space<vmem>>, %arg4: memref<64x128xf32, #tpu.memory_space<vmem>>, %arg5: memref<3x1x64xf32, #tpu.memory_space<vmem>>, %arg6: memref<1x128xf32, #tpu.memory_space<vmem>>, %arg7: memref<8x128xf32, #tpu.memory_space<vmem>>) attributes {dimension_semantics = [#tpu.dimension_semantics<parallel>], iteration_bounds = array<i64: 3>, scalar_prefetch = 0 : i64, scratch_operands = 0 : i64, tpu.core_type = #tpu.core_type<tc>, window_params = [{transform_indices = @transform_0, window_bounds = array<i64: 8, 16>}, {pipeline_mode = #tpu.pipeline_mode<synchronous>, transform_indices = @transform_1, window_bounds = array<i64: 16, 64>}, {pipeline_mode = #tpu.pipeline_mode<synchronous>, transform_indices = @transform_2, window_bounds = array<i64: 2, 64, 64>}, {pipeline_mode = #tpu.pipeline_mode<synchronous>, transform_indices = @transform_3, window_bounds = array<i64: 64, 128>}, {pipeline_mode = #tpu.pipeline_mode<synchronous>, transform_indices = @transform_4, window_bounds = array<i64: 3, 1, 64>}, {pipeline_mode = #tpu.pipeline_mode<synchronous>, transform_indices = @transform_5, window_bounds = array<i64: 1, 128>}, {transform_indices = @transform_6, window_bounds = array<i64: 8, 128>}]} {
    %c0 = arith.constant 0 : index
    %c0_0 = arith.constant 0 : index
    %0 = vector.load %arg1[%c0, %c0_0] : memref<8x16xf32, #tpu.memory_space<vmem>>, vector<8x16xf32>
    %c0_1 = arith.constant 0 : index
    %c0_2 = arith.constant 0 : index
    %1 = vector.load %arg2[%c0_1, %c0_2] : memref<16x64xf32, #tpu.memory_space<vmem>>, vector<16x64xf32>
    %cst = arith.constant dense<0.000000e+00> : vector<8x64xf32>
    %2 = tpu.matmul %0, %1, %cst {dimension_numbers = #tpu.dot_dimension_numbers<[1], [0], [0], [1], [0, 0, 1, 1], [], []>} : vector<8x16xf32>, vector<16x64xf32>, vector<8x64xf32> -> vector<8x64xf32>
    %c0_3 = arith.constant 0 : index
    %c0_4 = arith.constant 0 : index
    %c0_5 = arith.constant 0 : index
    %3 = vector.load %arg5[%c0_3, %c0_4, %c0_5] : memref<3x1x64xf32, #tpu.memory_space<vmem>>, vector<1x1x64xf32>
    %4 = vector.shape_cast %3 : vector<1x1x64xf32> to vector<1x64xf32>
    %5 = vector.broadcast %4 : vector<1x64xf32> to vector<8x64xf32>
    %6 = arith.addf %2, %5 : vector<8x64xf32>
    %7 = math.tanh %6 : vector<8x64xf32>
    %c0_6 = arith.constant 0 : index
    %c0_7 = arith.constant 0 : index
    %c0_8 = arith.constant 0 : index
    %8 = vector.load %arg3[%c0_6, %c0_7, %c0_8] : memref<2x64x64xf32, #tpu.memory_space<vmem>>, vector<1x64x64xf32>
    %9 = vector.shape_cast %8 : vector<1x64x64xf32> to vector<64x64xf32>
    %cst_9 = arith.constant dense<0.000000e+00> : vector<8x64xf32>
    %10 = tpu.matmul %7, %9, %cst_9 {dimension_numbers = #tpu.dot_dimension_numbers<[1], [0], [0], [1], [0, 0, 1, 1], [], []>} : vector<8x64xf32>, vector<64x64xf32>, vector<8x64xf32> -> vector<8x64xf32>
    %c1 = arith.constant 1 : index
    %c0_10 = arith.constant 0 : index
    %c0_11 = arith.constant 0 : index
    %11 = vector.load %arg5[%c1, %c0_10, %c0_11] : memref<3x1x64xf32, #tpu.memory_space<vmem>>, vector<1x1x64xf32>
    %12 = vector.shape_cast %11 : vector<1x1x64xf32> to vector<1x64xf32>
    %13 = vector.broadcast %12 : vector<1x64xf32> to vector<8x64xf32>
    %14 = arith.addf %10, %13 : vector<8x64xf32>
    %15 = math.tanh %14 : vector<8x64xf32>
    %c1_12 = arith.constant 1 : index
    %c0_13 = arith.constant 0 : index
    %c0_14 = arith.constant 0 : index
    %16 = vector.load %arg3[%c1_12, %c0_13, %c0_14] : memref<2x64x64xf32, #tpu.memory_space<vmem>>, vector<1x64x64xf32>
    %17 = vector.shape_cast %16 : vector<1x64x64xf32> to vector<64x64xf32>
    %cst_15 = arith.constant dense<0.000000e+00> : vector<8x64xf32>
    %18 = tpu.matmul %15, %17, %cst_15 {dimension_numbers = #tpu.dot_dimension_numbers<[1], [0], [0], [1], [0, 0, 1, 1], [], []>} : vector<8x64xf32>, vector<64x64xf32>, vector<8x64xf32> -> vector<8x64xf32>
    %c2 = arith.constant 2 : index
    %c0_16 = arith.constant 0 : index
    %c0_17 = arith.constant 0 : index
    %19 = vector.load %arg5[%c2, %c0_16, %c0_17] : memref<3x1x64xf32, #tpu.memory_space<vmem>>, vector<1x1x64xf32>
    %20 = vector.shape_cast %19 : vector<1x1x64xf32> to vector<1x64xf32>
    %21 = vector.broadcast %20 : vector<1x64xf32> to vector<8x64xf32>
    %22 = arith.addf %18, %21 : vector<8x64xf32>
    %23 = math.tanh %22 : vector<8x64xf32>
    %c0_18 = arith.constant 0 : index
    %c0_19 = arith.constant 0 : index
    %24 = vector.load %arg4[%c0_18, %c0_19] : memref<64x128xf32, #tpu.memory_space<vmem>>, vector<64x128xf32>
    %cst_20 = arith.constant dense<0.000000e+00> : vector<8x128xf32>
    %25 = tpu.matmul %23, %24, %cst_20 {dimension_numbers = #tpu.dot_dimension_numbers<[1], [0], [0], [1], [0, 0, 1, 1], [], []>} : vector<8x64xf32>, vector<64x128xf32>, vector<8x128xf32> -> vector<8x128xf32>
    %c0_21 = arith.constant 0 : index
    %c0_22 = arith.constant 0 : index
    %26 = vector.load %arg6[%c0_21, %c0_22] : memref<1x128xf32, #tpu.memory_space<vmem>>, vector<1x128xf32>
    %27 = vector.broadcast %26 : vector<1x128xf32> to vector<8x128xf32>
    %28 = arith.addf %25, %27 : vector<8x128xf32>
    %29 = math.tanh %28 : vector<8x128xf32>
    %c0_23 = arith.constant 0 : index
    %c0_24 = arith.constant 0 : index
    %30 = vector.load %arg7[%c0_23, %c0_24] : memref<8x128xf32, #tpu.memory_space<vmem>>, vector<8x128xf32>
    tpu.vector_store %arg7[%c0_23, %c0_24], %29 {strides = array<i32>} : memref<8x128xf32, #tpu.memory_space<vmem>>, vector<8x128xf32>,
    return
  }
  func.func @transform_0(%arg0: i32) -> (i32, i32) {
    %c0_i32 = arith.constant 0 : i32
    %c0_i32_0 = arith.constant 0 : i32
    return %arg0, %c0_i32 : i32, i32
  }
  func.func @transform_1(%arg0: i32) -> (i32, i32) {
    %c0_i32 = arith.constant 0 : i32
    %c0_i32_0 = arith.constant 0 : i32
    %c0_i32_1 = arith.constant 0 : i32
    return %c0_i32, %c0_i32_0 : i32, i32
  }
  func.func @transform_2(%arg0: i32) -> (i32, i32, i32) {
    %c0_i32 = arith.constant 0 : i32
    %c0_i32_0 = arith.constant 0 : i32
    %c0_i32_1 = arith.constant 0 : i32
    %c0_i32_2 = arith.constant 0 : i32
    return %c0_i32, %c0_i32_0, %c0_i32_1 : i32, i32, i32
  }
  func.func @transform_3(%arg0: i32) -> (i32, i32) {
    %c0_i32 = arith.constant 0 : i32
    %c0_i32_0 = arith.constant 0 : i32
    %c0_i32_1 = arith.constant 0 : i32
    return %c0_i32, %c0_i32_0 : i32, i32
  }
  func.func @transform_4(%arg0: i32) -> (i32, i32, i32) {
    %c0_i32 = arith.constant 0 : i32
    %c0_i32_0 = arith.constant 0 : i32
    %c0_i32_1 = arith.constant 0 : i32
    %c0_i32_2 = arith.constant 0 : i32
    return %c0_i32, %c0_i32_0, %c0_i32_1 : i32, i32, i32
  }
  func.func @transform_5(%arg0: i32) -> (i32, i32) {
    %c0_i32 = arith.constant 0 : i32
    %c0_i32_0 = arith.constant 0 : i32
    %c0_i32_1 = arith.constant 0 : i32
    return %c0_i32, %c0_i32_0 : i32, i32
  }
  func.func @transform_6(%arg0: i32) -> (i32, i32) {
    %c0_i32 = arith.constant 0 : i32
    %c0_i32_0 = arith.constant 0 : i32
    return %arg0, %c0_i32 : i32, i32
  }
}

</mosaic_0001>

<llo_original>
// kernel: tpu_custom_call.1
$region0: #{tpu_custom_call.1}
  #allocation0 [shape = 'u32[]', space=smem, size = 0x4, offset = 0x4, fixed_abs, tag = 'smem constant byte address 0x4 - core index']
  #allocation1 [shape = 'u32[144,128]{1,0:T(1,128)}', space=vmem, size = 0x12000, scoped, tag = 'internal scratch']
  %s0 = inlined_call_operand.vmem [shape: f32[24,16], index: 0, kind: input, shape index: {}]
  %s1 = inlined_call_operand.vmem [shape: f32[16,64], index: 1, kind: input, shape index: {}]
  %s2 = inlined_call_operand.hbm [shape: f32[2,64,64], index: 2, kind: input, shape index: {}]
  %s3 = inlined_call_operand.hbm [shape: f32[64,128], index: 3, kind: input, shape index: {}]
  %s4 = inlined_call_operand.vmem [shape: f32[3,1,64], index: 4, kind: input, shape index: {}]
  %s5 = inlined_call_operand.vmem [shape: f32[1,128], index: 5, kind: input, shape index: {}]
  %s6 = inlined_call_operand.hbm [shape: f32[24,128], index: 6, kind: output, shape index: {}]
  %s7 = sld [smem:[#allocation0]]
  $region65: #{tpu_custom_call.1} parent=0
    _
  %s9 = ssub.s32 1, %s7
  %s10 = scalar_select 0, %s9, %s7
  $region1: #{tpu_custom_call.1} parent=0
    #allocation2 [shape = 'u8[65536]{0}', space=vmem, size = 0x10000, scoped, tag = 'input window, operand 2, single buffered']
    #allocation3 [shape = 's32[2]{0}', space=sflag, size = 0x8, scoped, tag = 'scoped memory for tpu_custom_call.1']
    #allocation4 [shape = 's32[2]{0}', space=sflag, size = 0x8, scoped, tag = 'scoped memory for tpu_custom_call.1']
    #allocation5 [shape = 'u8[32768]{0}', space=vmem, size = 0x8000, scoped, tag = 'input window, operand 3, single buffered']
    #allocation6 [shape = 's32[1]{0}', space=sflag, size = 0x4, scoped, tag = 'scoped memory for tpu_custom_call.1']
    #allocation7 [shape = 'u8[8192]{0}', space=vmem, size = 0x2000, scoped, tag = 'output window, operand 0']
    %11 = vsyncpa [#allocation3], 0
    %12 = vsyncpa [#allocation6], 0
    %13 = vsyncpa [#allocation4], 0
    %s14 = scalar_lea.sflag [#allocation4], 1
    %15 = vsyncpa %s14, 0
    loop: start=0, step=1, limit=5
    $region2: #{tpu_custom_call.1} parent=1 // loop_pre_header
      _
    $region3: #{tpu_custom_call.1} parent=1 // loop_header
      %s17 = sphi 0, %s21
      %p18 = scmp.ge.s32.totalorder %s17, 5
      %s27 = sphi 0, %s29
      %s30 = sphi 0, %s27
      %s31 = sphi 0, %s30
      %s47 = sphi 0, %s31
      %s51 = sphi 0, %s51
      %s53 = sphi 0, %s51
      %s54 = sphi 0, %s53
      %s68 = sphi 0, %s54
      %s72 = sphi 0, %s72
      %s74 = sphi 0, %s72
      %s75 = sphi 0, %s74
      %s89 = sphi 0, %s75
      %s93 = sphi 0, %s93
      %s95 = sphi 0, %s93
      %s96 = sphi 0, %s95
      %s110 = sphi 0, %s96
      %s114 = sphi 0, %s114
      %s116 = sphi 0, %s114
      %s117 = sphi 0, %s116
      %s131 = sphi 0, %s117
      %s135 = sphi 0, %s135
      %s137 = sphi 0, %s135
      %s138 = sphi 0, %s137
      %s152 = sphi 0, %s138
      %s158 = sphi 0, %s160
      %s161 = sphi 0, %s158
      %s162 = sphi 0, %s161
      %s178 = sphi 0, %s162
    $region4: #{tpu_custom_call.1} parent=1 // loop_header_branch
      %20 = sbr.rel (%p18) target = $region8
    $region5: #{tpu_custom_call.1} parent=1 // loop_body
      %s22 = ssub.s32 %s17, 1
      %s23 = ssub.s32 %s17, 2
      %s24 = sadd.s32 %s17, 1
      %s25 = ssub.s32 %s17, %s24
      %p26 = scmp.eq.s32.totalorder %s25, 0
      %s28 = sadd.s32 %s27, 1
      %s29 = scalar_select %p26, %s27, %s28
      %p32 = pneg %p26
      %p33 = scmp.eq.s32.totalorder %s17, 2
      %p34 = por %p32, %p33
      %p35 = scmp.ne.s32.totalorder %s27, %s30
      %p36 = scmp.eq.s32.totalorder %s17, 0
      %p37 = por %p35, %p36
      %p38 = scmp.ne.s32.totalorder %s27, %s30
      %p39 = scmp.eq.s32.totalorder %s22, 2
      %p40 = por %p38, %p39
      %p41 = scmp.ne.s32.totalorder %s30, %s31
      %p42 = scmp.eq.s32.totalorder %s22, 0
      %p43 = por %p41, %p42
      %p44 = scmp.ne.s32.totalorder %s30, %s31
      %p45 = scmp.eq.s32.totalorder %s23, 2
      %p46 = por %p44, %p45
      %p48 = scmp.ne.s32.totalorder %s31, %s47
      %p49 = scmp.eq.s32.totalorder %s23, 0
      %p50 = por %p48, %p49
      %s52 = sadd.s32 %s51, 1
      %p55 = scmp.eq.s32.totalorder %s17, 2
      %p56 = scmp.ne.s32.totalorder %s51, %s53
      %p57 = scmp.eq.s32.totalorder %s17, 0
      %p58 = por %p56, %p57
      %p59 = scmp.ne.s32.totalorder %s51, %s53
      %p60 = scmp.eq.s32.totalorder %s22, 2
      %p61 = por %p59, %p60
      %p62 = scmp.ne.s32.totalorder %s53, %s54
      %p63 = scmp.eq.s32.totalorder %s22, 0
      %p64 = por %p62, %p63
      %p65 = scmp.ne.s32.totalorder %s53, %s54
      %p66 = scmp.eq.s32.totalorder %s23, 2
      %p67 = por %p65, %p66
      %p69 = scmp.ne.s32.totalorder %s54, %s68
      %p70 = scmp.eq.s32.totalorder %s23, 0
      %p71 = por %p69, %p70
      %s73 = sadd.s32 %s72, 1
      %p76 = scmp.eq.s32.totalorder %s17, 2
      %p77 = scmp.ne.s32.totalorder %s72, %s74
      %p78 = scmp.eq.s32.totalorder %s17, 0
      %p79 = por %p77, %p78
      %p80 = scmp.ne.s32.totalorder %s72, %s74
      %p81 = scmp.eq.s32.totalorder %s22, 2
      %p82 = por %p80, %p81
      %p83 = scmp.ne.s32.totalorder %s74, %s75
      %p84 = scmp.eq.s32.totalorder %s22, 0
      %p85 = por %p83, %p84
      %p86 = scmp.ne.s32.totalorder %s74, %s75
      %p87 = scmp.eq.s32.totalorder %s23, 2
      %p88 = por %p86, %p87
      %p90 = scmp.ne.s32.totalorder %s75, %s89
      %p91 = scmp.eq.s32.totalorder %s23, 0
      %p92 = por %p90, %p91
      %s94 = sadd.s32 %s93, 1
      %p97 = scmp.eq.s32.totalorder %s17, 2
      %p98 = scmp.ne.s32.totalorder %s93, %s95
      %p99 = scmp.eq.s32.totalorder %s17, 0
      %p100 = por %p98, %p99
      %p101 = scmp.ne.s32.totalorder %s93, %s95
      %p102 = scmp.eq.s32.totalorder %s22, 2
      %p103 = por %p101, %p102
      %p104 = scmp.ne.s32.totalorder %s95, %s96
      %p105 = scmp.eq.s32.totalorder %s22, 0
      %p106 = por %p104, %p105
      %p107 = scmp.ne.s32.totalorder %s95, %s96
      %p108 = scmp.eq.s32.totalorder %s23, 2
      %p109 = por %p107, %p108
      %p111 = scmp.ne.s32.totalorder %s96, %s110
      %p112 = scmp.eq.s32.totalorder %s23, 0
      %p113 = por %p111, %p112
      %s115 = sadd.s32 %s114, 1
      %p118 = scmp.eq.s32.totalorder %s17, 2
      %p119 = scmp.ne.s32.totalorder %s114, %s116
      %p120 = scmp.eq.s32.totalorder %s17, 0
      %p121 = por %p119, %p120
      %p122 = scmp.ne.s32.totalorder %s114, %s116
      %p123 = scmp.eq.s32.totalorder %s22, 2
      %p124 = por %p122, %p123
      %p125 = scmp.ne.s32.totalorder %s116, %s117
      %p126 = scmp.eq.s32.totalorder %s22, 0
      %p127 = por %p125, %p126
      %p128 = scmp.ne.s32.totalorder %s116, %s117
      %p129 = scmp.eq.s32.totalorder %s23, 2
      %p130 = por %p128, %p129
      %p132 = scmp.ne.s32.totalorder %s117, %s131
      %p133 = scmp.eq.s32.totalorder %s23, 0
      %p134 = por %p132, %p133
      %s136 = sadd.s32 %s135, 1
      %p139 = scmp.eq.s32.totalorder %s17, 2
      %p140 = scmp.ne.s32.totalorder %s135, %s137
      %p141 = scmp.eq.s32.totalorder %s17, 0
      %p142 = por %p140, %p141
      %p143 = scmp.ne.s32.totalorder %s135, %s137
      %p144 = scmp.eq.s32.totalorder %s22, 2
      %p145 = por %p143, %p144
      %p146 = scmp.ne.s32.totalorder %s137, %s138
      %p147 = scmp.eq.s32.totalorder %s22, 0
      %p148 = por %p146, %p147
      %p149 = scmp.ne.s32.totalorder %s137, %s138
      %p150 = scmp.eq.s32.totalorder %s23, 2
      %p151 = por %p149, %p150
      %p153 = scmp.ne.s32.totalorder %s138, %s152
      %p154 = scmp.eq.s32.totalorder %s23, 0
      %p155 = por %p153, %p154
      %s156 = ssub.s32 %s17, %s24
      %p157 = scmp.eq.s32.totalorder %s156, 0
      %s159 = sadd.s32 %s158, 1
      %s160 = scalar_select %p157, %s158, %s159
      %p163 = pneg %p157
      %p164 = scmp.eq.s32.totalorder %s17, 2
      %p165 = por %p163, %p164
      %p166 = scmp.ne.s32.totalorder %s158, %s161
      %p167 = scmp.eq.s32.totalorder %s17, 0
      %p168 = por %p166, %p167
      %p169 = scmp.ne.s32.totalorder %s158, %s161
      %p170 = scmp.eq.s32.totalorder %s22, 2
      %p171 = por %p169, %p170
      %p172 = scmp.ne.s32.totalorder %s161, %s162
      %p173 = scmp.eq.s32.totalorder %s22, 0
      %p174 = por %p172, %p173
      %p175 = scmp.ne.s32.totalorder %s161, %s162
      %p176 = scmp.eq.s32.totalorder %s23, 2
      %p177 = por %p175, %p176
      %p179 = scmp.ne.s32.totalorder %s162, %s178
      %p180 = scmp.eq.s32.totalorder %s23, 0
      %p181 = por %p179, %p180
      %p182 = scmp.le.s32.totalorder 1, %s17
      %p183 = scmp.lt.s32.totalorder %s17, 4
      %p184 = pnand %p182, %p183
      %p185 = pneg %p184
      // Predicated region
      $region9: #{tpu_custom_call.1} parent=5 // pred_check
        _
      $region10: #{tpu_custom_call.1} parent=5 // pred_check_branch
        %187 = sbr.rel (%p184) target = $region12
      $region11: #{tpu_custom_call.1} parent=5 // pred_region
        %s188 = ssub.s32 %s17, 1
        // Predicated region
        $region13: #{tpu_custom_call.1} parent=11 // pred_check
          %p189 = pneg %p64
        $region14: #{tpu_custom_call.1} parent=11 // pred_check_branch
          %191 = sbr.rel (%p189) target = $region16
        $region15: #{tpu_custom_call.1} parent=11 // pred_region
          _
        $region16: #{tpu_custom_call.1} parent=11 // pred_fallthru
          _
        // Predicated region
        $region17: #{tpu_custom_call.1} parent=11 // pred_check
          %p192 = pneg %p85
        $region18: #{tpu_custom_call.1} parent=11 // pred_check_branch
          %194 = sbr.rel (%p192) target = $region20
        $region19: #{tpu_custom_call.1} parent=11 // pred_region
          %s196 = ssub.s32 2048, 2048
          %197 = vsyncadd [#allocation3], %s196
          %s198 = sshll.u32 [#allocation2], 4
          %s199 = int_to_ptr.vmem [resolvable:$true] %s198
          %204 = dma.hbm_to_vmem [thread:$0]  %s2, 2048, %s199, [#allocation3], 128, 128, 8
        $region20: #{tpu_custom_call.1} parent=11 // pred_fallthru
          _
        // Predicated region
        $region21: #{tpu_custom_call.1} parent=11 // pred_check
          %p205 = pneg %p106
        $region22: #{tpu_custom_call.1} parent=11 // pred_check_branch
          %207 = sbr.rel (%p205) target = $region24
        $region23: #{tpu_custom_call.1} parent=11 // pred_region
          %s209 = ssub.s32 1024, 1024
          %210 = vsyncadd [#allocation6], %s209
          %s211 = sshll.u32 [#allocation5], 4
          %s212 = int_to_ptr.vmem [resolvable:$true] %s211
          %217 = dma.hbm_to_vmem [thread:$0]  %s3, 1024, %s212, [#allocation6], 128, 128, 8
        $region24: #{tpu_custom_call.1} parent=11 // pred_fallthru
          _
        // Predicated region
        $region25: #{tpu_custom_call.1} parent=11 // pred_check
          %p218 = pneg %p127
        $region26: #{tpu_custom_call.1} parent=11 // pred_check_branch
          %220 = sbr.rel (%p218) target = $region28
        $region27: #{tpu_custom_call.1} parent=11 // pred_region
          _
        $region28: #{tpu_custom_call.1} parent=11 // pred_fallthru
          _
        // Predicated region
        $region29: #{tpu_custom_call.1} parent=11 // pred_check
          %p221 = pneg %p148
        $region30: #{tpu_custom_call.1} parent=11 // pred_check_branch
          %223 = sbr.rel (%p221) target = $region32
        $region31: #{tpu_custom_call.1} parent=11 // pred_region
          _
        $region32: #{tpu_custom_call.1} parent=11 // pred_fallthru
          _
      $region12: #{tpu_custom_call.1} parent=5 // pred_fallthru
        _
      %p224 = scmp.lt.s32.totalorder %s17, 3
      // Predicated region
      $region33: #{tpu_custom_call.1} parent=5 // pred_check
        %p225 = pneg %p224
      $region34: #{tpu_custom_call.1} parent=5 // pred_check_branch
        %227 = sbr.rel (%p225) target = $region36
      $region35: #{tpu_custom_call.1} parent=5 // pred_region
        // Predicated region
        $region37: #{tpu_custom_call.1} parent=35 // pred_check
          %p228 = pneg %p37
        $region38: #{tpu_custom_call.1} parent=35 // pred_check_branch
          %230 = sbr.rel (%p228) target = $region40
        $region39: #{tpu_custom_call.1} parent=35 // pred_region
          %p231 = scmp.lt.s32.totalorder %s17, 2
          %s232 = scalar_select %p231, %s17, 2
          %s233 = smul.addr %s232, 8
          %s234 = scalar_lea.vmem %s0, %s233
        $region40: #{tpu_custom_call.1} parent=35 // pred_fallthru
          _
      $region36: #{tpu_custom_call.1} parent=5 // pred_fallthru
        _
      %p235 = scmp.le.s32.totalorder 1, %s17
      %p236 = scmp.lt.s32.totalorder %s17, 4
      %p237 = pnand %p235, %p236
      %p238 = pneg %p237
      // Predicated region
      $region41: #{tpu_custom_call.1} parent=5 // pred_check
        _
      $region42: #{tpu_custom_call.1} parent=5 // pred_check_branch
        %240 = sbr.rel (%p237) target = $region44
      $region43: #{tpu_custom_call.1} parent=5 // pred_region
        %s241 = ssub.s32 %s17, 1
        // Predicated region
        $region45: #{tpu_custom_call.1} parent=43 // pred_check
          %p242 = pneg %p85
        $region46: #{tpu_custom_call.1} parent=43 // pred_check_branch
          %244 = sbr.rel (%p242) target = $region48
        $region47: #{tpu_custom_call.1} parent=43 // pred_region
          %245 = dma.done [#allocation3], 2048
        $region48: #{tpu_custom_call.1} parent=43 // pred_fallthru
          _
        // Predicated region
        $region49: #{tpu_custom_call.1} parent=43 // pred_check
          %p246 = pneg %p106
        $region50: #{tpu_custom_call.1} parent=43 // pred_check_branch
          %248 = sbr.rel (%p246) target = $region52
        $region51: #{tpu_custom_call.1} parent=43 // pred_region
          %249 = dma.done [#allocation6], 1024
        $region52: #{tpu_custom_call.1} parent=43 // pred_fallthru
          _
        %p250 = scmp.lt.s32.totalorder %s22, 2
        %s251 = scalar_select %p250, %s22, 2
        %s252 = smul.addr %s251, 8
        %s253 = scalar_lea.vmem %s0, %s252
        %p254 = pneg %p43
        %p255 = pneg %p40
        %p256 = pneg %p64
        %p257 = pneg %p61
        %p258 = pneg %p85
        %p259 = pneg %p82
        %p260 = pneg %p106
        %p261 = pneg %p103
        %p262 = pneg %p127
        %p263 = pneg %p124
        %p264 = pneg %p148
        %p265 = pneg %p145
        %p266 = pneg %p174
        %p267 = pneg %p171
        %s268 = sand.u32 %s161, 1
        %s269 = scalar_lea.sflag [#allocation4], %s268
        %s270 = sand.u32 %s161, 1
        %s271 = smul.addr %s270, 8
        %s272 = scalar_lea.vmem [#allocation7], %s271
        %p273 = scmp.lt.s32.totalorder %s22, 2
        %s274 = scalar_select %p273, %s22, 2
        %s275 = smul.addr %s274, 8
        %s276 = scalar_lea.vmem %s0, %s275
        %v277 = vld [vmem:[%s276] sm:$0xff]
        %v278 = vld [vmem:[%s1] sm:$0xff]
        %v279 = vld [vmem:[%s1 + $0x8] sm:$0xff]
        %v280 = vld [vmem:[%s4] sm:$0x1]
        %v282 = vlaneseq
        %v283 = vshrl.u32 %v282, 7
        %v284 = vsub.s32 0, %v283
        %v285 = vrot.slane %v280, %v284
        %vm287 = vcmask 130048
        %v289 = vsel %vm287, %v277, 0
        %291 = vmatprep.subr.mxu0 0.0
        %292 = vmatpush1.msra.mxu0 %v278
        %293 = vmatprep.subr.mxu0 0.0
        %294 = vmatpush1.msra.mxu0 %v279
        %295 = vmatprep.subr.mxu0 0.0
        %296 = vmatpush1.msra.mxu0 0.0
        %297 = vmatprep.subr.mxu0 0.0
        %298 = vmatpush1.msra.mxu0 0.0
        %299 = vmatprep.subr.mxu0 0.0
        %300 = vmatpush1.msra.mxu0 0.0
        %301 = vmatprep.subr.mxu0 0.0
        %302 = vmatpush1.msra.mxu0 0.0
        %303 = vmatprep.subr.mxu0 0.0
        %304 = vmatpush1.msra.mxu0 0.0
        %305 = vmatprep.subr.mxu0 0.0
        %306 = vmatpush1.msra.mxu0 0.0
        %307 = vmatprep.subr.mxu0 0.0
        %308 = vmatpush1.msra.mxu0 0.0
        %309 = vmatprep.subr.mxu0 0.0
        %310 = vmatpush1.msra.mxu0 0.0
        %311 = vmatprep.subr.mxu0 0.0
        %312 = vmatpush1.msra.mxu0 0.0
        %313 = vmatprep.subr.mxu0 0.0
        %314 = vmatpush1.msra.mxu0 0.0
        %315 = vmatprep.subr.mxu0 0.0
        %316 = vmatpush1.msra.mxu0 0.0
        %317 = vmatprep.subr.mxu0 0.0
        %318 = vmatpush1.msra.mxu0 0.0
        %319 = vmatprep.subr.mxu0 0.0
        %320 = vmatpush1.msra.mxu0 0.0
        %321 = vmatprep.subr.mxu0 0.0
        %322 = vmatpush1.msra.mxu0 0.0
        %323 = vmatprep.subr.mxu0 0.0
        %324 = vmatpush1.msra.mxu0 0.0
        %325 = vmatprep.subr.mxu0 0.0
        %326 = vmatpush1.msra.mxu0 0.0
        %327 = vmatprep.subr.mxu0 0.0
        %328 = vmatpush1.msra.mxu0 0.0
        %329 = vmatprep.subr.mxu0 0.0
        %330 = vmatpush1.msra.mxu0 0.0
        %331 = vmatprep.subr.mxu0 0.0
        %332 = vmatpush1.msra.mxu0 0.0
        %333 = vmatprep.subr.mxu0 0.0
        %334 = vmatpush1.msra.mxu0 0.0
        %335 = vmatprep.subr.mxu0 0.0
        %336 = vmatpush1.msra.mxu0 0.0
        %337 = vmatprep.subr.mxu0 0.0
        %338 = vmatpush1.msra.mxu0 0.0
        %339 = vmatprep.subr.mxu0 0.0
        %340 = vmatpush1.msra.mxu0 0.0
        %341 = vmatprep.subr.mxu0 0.0
        %342 = vmatpush1.msra.mxu0 0.0
        %343 = vmatprep.subr.mxu0 0.0
        %344 = vmatpush1.msra.mxu0 0.0
        %345 = vmatprep.subr.mxu0 0.0
        %346 = vmatpush1.msra.mxu0 0.0
        %347 = vmatprep.subr.mxu0 0.0
        %348 = vmatpush1.msra.mxu0 0.0
        %349 = vmatprep.subr.mxu0 0.0
        %350 = vmatpush1.msra.mxu0 0.0
        %351 = vmatprep.subr.mxu0 0.0
        %352 = vmatpush1.msra.mxu0 0.0
        %353 = vmatprep.subr.mxu0 0.0
        %354 = vmatpush1.msra.mxu0 0.0
        %355 = vmatprep.mubr.f32.mxu0 0.0
        %356 = vmatmul.mubr.f32.gmra.mrb[0].mxu0 %v289
        %v357 = vpop.f32.mrb[0].mxu0
        %v358 = vadd.f32 %v285, %v357
        %v359 = vpop.f32.mrb[0].mxu0
        %360 = vdwg.mxu0
        %v361 = vtanh.pop %v358
        %v362 = vld [vmem:[#allocation2] sm:$0xff]
        %v363 = vld [vmem:[#allocation2 + $0x8] sm:$0xff]
        %v364 = vld [vmem:[#allocation2 + $0x10] sm:$0xff]
        %v365 = vld [vmem:[#allocation2 + $0x18] sm:$0xff]
        %v366 = vld [vmem:[#allocation2 + $0x20] sm:$0xff]
        %v367 = vld [vmem:[#allocation2 + $0x28] sm:$0xff]
        %v368 = vld [vmem:[#allocation2 + $0x30] sm:$0xff]
        %v369 = vld [vmem:[#allocation2 + $0x38] sm:$0xff]
        %s370 = scalar_lea.vmem %s4, 1
        %v371 = vld [vmem:[%s370] sm:$0x1]
        %v373 = vlaneseq
        %v374 = vshrl.u32 %v373, 7
        %v375 = vsub.s32 0, %v374
        %v376 = vrot.slane %v371, %v375
        %vm378 = vcmask 523264
        %v380 = vsel %vm378, %v361, 0
        %382 = vmatprep.subr.mxu0 0.0
        %383 = vmatpush1.msra.mxu0 %v362
        %384 = vmatprep.subr.mxu0 0.0
        %385 = vmatpush1.msra.mxu0 %v363
        %386 = vmatprep.subr.mxu0 0.0
        %387 = vmatpush1.msra.mxu0 %v364
        %388 = vmatprep.subr.mxu0 0.0
        %389 = vmatpush1.msra.mxu0 %v365
        %390 = vmatprep.subr.mxu0 0.0
        %391 = vmatpush1.msra.mxu0 %v366
        %392 = vmatprep.subr.mxu0 0.0
        %393 = vmatpush1.msra.mxu0 %v367
        %394 = vmatprep.subr.mxu0 0.0
        %395 = vmatpush1.msra.mxu0 %v368
        %396 = vmatprep.subr.mxu0 0.0
        %397 = vmatpush1.msra.mxu0 %v369
        %398 = vmatprep.subr.mxu0 0.0
        %399 = vmatpush1.msra.mxu0 0.0
        %400 = vmatprep.subr.mxu0 0.0
        %401 = vmatpush1.msra.mxu0 0.0
        %402 = vmatprep.subr.mxu0 0.0
        %403 = vmatpush1.msra.mxu0 0.0
        %404 = vmatprep.subr.mxu0 0.0
        %405 = vmatpush1.msra.mxu0 0.0
        %406 = vmatprep.subr.mxu0 0.0
        %407 = vmatpush1.msra.mxu0 0.0
        %408 = vmatprep.subr.mxu0 0.0
        %409 = vmatpush1.msra.mxu0 0.0
        %410 = vmatprep.subr.mxu0 0.0
        %411 = vmatpush1.msra.mxu0 0.0
        %412 = vmatprep.subr.mxu0 0.0
        %413 = vmatpush1.msra.mxu0 0.0
        %414 = vmatprep.subr.mxu0 0.0
        %415 = vmatpush1.msra.mxu0 0.0
        %416 = vmatprep.subr.mxu0 0.0
        %417 = vmatpush1.msra.mxu0 0.0
        %418 = vmatprep.subr.mxu0 0.0
        %419 = vmatpush1.msra.mxu0 0.0
        %420 = vmatprep.subr.mxu0 0.0
        %421 = vmatpush1.msra.mxu0 0.0
        %422 = vmatprep.subr.mxu0 0.0
        %423 = vmatpush1.msra.mxu0 0.0
        %424 = vmatprep.subr.mxu0 0.0
        %425 = vmatpush1.msra.mxu0 0.0
        %426 = vmatprep.subr.mxu0 0.0
        %427 = vmatpush1.msra.mxu0 0.0
        %428 = vmatprep.subr.mxu0 0.0
        %429 = vmatpush1.msra.mxu0 0.0
        %430 = vmatprep.subr.mxu0 0.0
        %431 = vmatpush1.msra.mxu0 0.0
        %432 = vmatprep.subr.mxu0 0.0
        %433 = vmatpush1.msra.mxu0 0.0
        %434 = vmatprep.subr.mxu0 0.0
        %435 = vmatpush1.msra.mxu0 0.0
        %436 = vmatprep.subr.mxu0 0.0
        %437 = vmatpush1.msra.mxu0 0.0
        %438 = vmatprep.subr.mxu0 0.0
        %439 = vmatpush1.msra.mxu0 0.0
        %440 = vmatprep.subr.mxu0 0.0
        %441 = vmatpush1.msra.mxu0 0.0
        %442 = vmatprep.subr.mxu0 0.0
        %443 = vmatpush1.msra.mxu0 0.0
        %444 = vmatprep.subr.mxu0 0.0
        %445 = vmatpush1.msra.mxu0 0.0
        %446 = vmatprep.mubr.f32.mxu0 0.0
        %447 = vmatmul.mubr.f32.gmra.mrb[0].mxu0 %v380
        %v448 = vpop.f32.mrb[0].mxu0
        %v449 = vadd.f32 %v376, %v448
        %v450 = vpop.f32.mrb[0].mxu0
        %451 = vdwg.mxu0
        %v452 = vtanh.pop %v449
        %s453 = scalar_lea.vmem [#allocation2], 64
        %v454 = vld [vmem:[%s453] sm:$0xff]
        %v455 = vld [vmem:[%s453 + $0x8] sm:$0xff]
        %v456 = vld [vmem:[%s453 + $0x10] sm:$0xff]
        %v457 = vld [vmem:[%s453 + $0x18] sm:$0xff]
        %v458 = vld [vmem:[%s453 + $0x20] sm:$0xff]
        %v459 = vld [vmem:[%s453 + $0x28] sm:$0xff]
        %v460 = vld [vmem:[%s453 + $0x30] sm:$0xff]
        %v461 = vld [vmem:[%s453 + $0x38] sm:$0xff]
        %s462 = scalar_lea.vmem %s4, 2
        %v463 = vld [vmem:[%s462] sm:$0x1]
        %v465 = vlaneseq
        %v466 = vshrl.u32 %v465, 7
        %v467 = vsub.s32 0, %v466
        %v468 = vrot.slane %v463, %v467
        %v471 = vsel %vm378, %v452, 0
        %473 = vmatprep.subr.mxu0 0.0
        %474 = vmatpush1.msra.mxu0 %v454
        %475 = vmatprep.subr.mxu0 0.0
        %476 = vmatpush1.msra.mxu0 %v455
        %477 = vmatprep.subr.mxu0 0.0
        %478 = vmatpush1.msra.mxu0 %v456
        %479 = vmatprep.subr.mxu0 0.0
        %480 = vmatpush1.msra.mxu0 %v457
        %481 = vmatprep.subr.mxu0 0.0
        %482 = vmatpush1.msra.mxu0 %v458
        %483 = vmatprep.subr.mxu0 0.0
        %484 = vmatpush1.msra.mxu0 %v459
        %485 = vmatprep.subr.mxu0 0.0
        %486 = vmatpush1.msra.mxu0 %v460
        %487 = vmatprep.subr.mxu0 0.0
        %488 = vmatpush1.msra.mxu0 %v461
        %489 = vmatprep.subr.mxu0 0.0
        %490 = vmatpush1.msra.mxu0 0.0
        %491 = vmatprep.subr.mxu0 0.0
        %492 = vmatpush1.msra.mxu0 0.0
        %493 = vmatprep.subr.mxu0 0.0
        %494 = vmatpush1.msra.mxu0 0.0
        %495 = vmatprep.subr.mxu0 0.0
        %496 = vmatpush1.msra.mxu0 0.0
        %497 = vmatprep.subr.mxu0 0.0
        %498 = vmatpush1.msra.mxu0 0.0
        %499 = vmatprep.subr.mxu0 0.0
        %500 = vmatpush1.msra.mxu0 0.0
        %501 = vmatprep.subr.mxu0 0.0
        %502 = vmatpush1.msra.mxu0 0.0
        %503 = vmatprep.subr.mxu0 0.0
        %504 = vmatpush1.msra.mxu0 0.0
        %505 = vmatprep.subr.mxu0 0.0
        %506 = vmatpush1.msra.mxu0 0.0
        %507 = vmatprep.subr.mxu0 0.0
        %508 = vmatpush1.msra.mxu0 0.0
        %509 = vmatprep.subr.mxu0 0.0
        %510 = vmatpush1.msra.mxu0 0.0
        %511 = vmatprep.subr.mxu0 0.0
        %512 = vmatpush1.msra.mxu0 0.0
        %513 = vmatprep.subr.mxu0 0.0
        %514 = vmatpush1.msra.mxu0 0.0
        %515 = vmatprep.subr.mxu0 0.0
        %516 = vmatpush1.msra.mxu0 0.0
        %517 = vmatprep.subr.mxu0 0.0
        %518 = vmatpush1.msra.mxu0 0.0
        %519 = vmatprep.subr.mxu0 0.0
        %520 = vmatpush1.msra.mxu0 0.0
        %521 = vmatprep.subr.mxu0 0.0
        %522 = vmatpush1.msra.mxu0 0.0
        %523 = vmatprep.subr.mxu0 0.0
        %524 = vmatpush1.msra.mxu0 0.0
        %525 = vmatprep.subr.mxu0 0.0
        %526 = vmatpush1.msra.mxu0 0.0
        %527 = vmatprep.subr.mxu0 0.0
        %528 = vmatpush1.msra.mxu0 0.0
        %529 = vmatprep.subr.mxu0 0.0
        %530 = vmatpush1.msra.mxu0 0.0
        %531 = vmatprep.subr.mxu0 0.0
        %532 = vmatpush1.msra.mxu0 0.0
        %533 = vmatprep.subr.mxu0 0.0
        %534 = vmatpush1.msra.mxu0 0.0
        %535 = vmatprep.subr.mxu0 0.0
        %536 = vmatpush1.msra.mxu0 0.0
        %537 = vmatprep.mubr.f32.mxu0 0.0
        %538 = vmatmul.mubr.f32.gmra.mrb[0].mxu0 %v471
        %v539 = vpop.f32.mrb[0].mxu0
        %v540 = vadd.f32 %v468, %v539
        %v541 = vpop.f32.mrb[0].mxu0
        %542 = vdwg.mxu0
        %v543 = vtanh.pop %v540
        %v544 = vld [vmem:[#allocation5] sm:$0xff]
        %v545 = vld [vmem:[#allocation5 + $0x8] sm:$0xff]
        %v546 = vld [vmem:[#allocation5 + $0x10] sm:$0xff]
        %v547 = vld [vmem:[#allocation5 + $0x18] sm:$0xff]
        %v548 = vld [vmem:[#allocation5 + $0x20] sm:$0xff]
        %v549 = vld [vmem:[#allocation5 + $0x28] sm:$0xff]
        %v550 = vld [vmem:[#allocation5 + $0x30] sm:$0xff]
        %v551 = vld [vmem:[#allocation5 + $0x38] sm:$0xff]
        %v552 = vld [vmem:[%s5] sm:$0x1]
        %v554 = vlaneseq
        %v555 = vshrl.u32 %v554, 7
        %v556 = vsub.s32 0, %v555
        %v557 = vrot.slane %v552, %v556
        %v560 = vsel %vm378, %v543, 0
        %562 = vmatprep.subr.mxu0 0.0
        %563 = vmatpush1.msra.mxu0 %v544
        %564 = vmatprep.subr.mxu0 0.0
        %565 = vmatpush1.msra.mxu0 %v545
        %566 = vmatprep.subr.mxu0 0.0
        %567 = vmatpush1.msra.mxu0 %v546
        %568 = vmatprep.subr.mxu0 0.0
        %569 = vmatpush1.msra.mxu0 %v547
        %570 = vmatprep.subr.mxu0 0.0
        %571 = vmatpush1.msra.mxu0 %v548
        %572 = vmatprep.subr.mxu0 0.0
        %573 = vmatpush1.msra.mxu0 %v549
        %574 = vmatprep.subr.mxu0 0.0
        %575 = vmatpush1.msra.mxu0 %v550
        %576 = vmatprep.subr.mxu0 0.0
        %577 = vmatpush1.msra.mxu0 %v551
        %578 = vmatprep.subr.mxu0 0.0
        %579 = vmatpush1.msra.mxu0 0.0
        %580 = vmatprep.subr.mxu0 0.0
        %581 = vmatpush1.msra.mxu0 0.0
        %582 = vmatprep.subr.mxu0 0.0
        %583 = vmatpush1.msra.mxu0 0.0
        %584 = vmatprep.subr.mxu0 0.0
        %585 = vmatpush1.msra.mxu0 0.0
        %586 = vmatprep.subr.mxu0 0.0
        %587 = vmatpush1.msra.mxu0 0.0
        %588 = vmatprep.subr.mxu0 0.0
        %589 = vmatpush1.msra.mxu0 0.0
        %590 = vmatprep.subr.mxu0 0.0
        %591 = vmatpush1.msra.mxu0 0.0
        %592 = vmatprep.subr.mxu0 0.0
        %593 = vmatpush1.msra.mxu0 0.0
        %594 = vmatprep.subr.mxu0 0.0
        %595 = vmatpush1.msra.mxu0 0.0
        %596 = vmatprep.subr.mxu0 0.0
        %597 = vmatpush1.msra.mxu0 0.0
        %598 = vmatprep.subr.mxu0 0.0
        %599 = vmatpush1.msra.mxu0 0.0
        %600 = vmatprep.subr.mxu0 0.0
        %601 = vmatpush1.msra.mxu0 0.0
        %602 = vmatprep.subr.mxu0 0.0
        %603 = vmatpush1.msra.mxu0 0.0
        %604 = vmatprep.subr.mxu0 0.0
        %605 = vmatpush1.msra.mxu0 0.0
        %606 = vmatprep.subr.mxu0 0.0
        %607 = vmatpush1.msra.mxu0 0.0
        %608 = vmatprep.subr.mxu0 0.0
        %609 = vmatpush1.msra.mxu0 0.0
        %610 = vmatprep.subr.mxu0 0.0
        %611 = vmatpush1.msra.mxu0 0.0
        %612 = vmatprep.subr.mxu0 0.0
        %613 = vmatpush1.msra.mxu0 0.0
        %614 = vmatprep.subr.mxu0 0.0
        %615 = vmatpush1.msra.mxu0 0.0
        %616 = vmatprep.subr.mxu0 0.0
        %617 = vmatpush1.msra.mxu0 0.0
        %618 = vmatprep.subr.mxu0 0.0
        %619 = vmatpush1.msra.mxu0 0.0
        %620 = vmatprep.subr.mxu0 0.0
        %621 = vmatpush1.msra.mxu0 0.0
        %622 = vmatprep.subr.mxu0 0.0
        %623 = vmatpush1.msra.mxu0 0.0
        %624 = vmatprep.subr.mxu0 0.0
        %625 = vmatpush1.msra.mxu0 0.0
        %626 = vmatprep.mubr.f32.mxu0 0.0
        %627 = vmatmul.mubr.f32.gmra.mrb[0].mxu0 %v560
        %v628 = vpop.f32.mrb[0].mxu0
        %v629 = vadd.f32 %v557, %v628
        %v630 = vpop.f32.mrb[0].mxu0
        %631 = vdwg.mxu0
        %v632 = vtanh.pop %v629
        %633 = vst [vmem:[%s272] sm:$0xff] %v632
        %s634 = sand.u32 %s161, 1
        %s635 = scalar_lea.sflag [#allocation4], %s634
        %s636 = sand.u32 %s161, 1
        %s637 = smul.addr %s636, 8
        %s638 = scalar_lea.vmem [#allocation7], %s637
        // Predicated region
        $region53: #{tpu_custom_call.1} parent=43 // pred_check
          %p639 = pneg %p171
        $region54: #{tpu_custom_call.1} parent=43 // pred_check_branch
          %641 = sbr.rel (%p639) target = $region56
        $region55: #{tpu_custom_call.1} parent=43 // pred_region
          %s643 = ssub.s32 128, 128
          %644 = vsyncadd %s635, %s643
          %s645 = smul.addr %s22, 128
          %s646 = scalar_lea.hbm %s6, %s645
          %s648 = sshll.u32 %s638, 4
          %s649 = int_to_ptr.vmem [resolvable:$true] %s648
          %651 = dma.vmem_to_hbm [thread:$0]  %s649, 128, %s646, %s635
        $region56: #{tpu_custom_call.1} parent=43 // pred_fallthru
          _
      $region44: #{tpu_custom_call.1} parent=5 // pred_fallthru
        _
      %p652 = scmp.le.s32.totalorder 2, %s17
      // Predicated region
      $region57: #{tpu_custom_call.1} parent=5 // pred_check
        %p653 = pneg %p652
      $region58: #{tpu_custom_call.1} parent=5 // pred_check_branch
        %655 = sbr.rel (%p653) target = $region60
      $region59: #{tpu_custom_call.1} parent=5 // pred_region
        %s656 = ssub.s32 %s17, 2
        // Predicated region
        $region61: #{tpu_custom_call.1} parent=59 // pred_check
          %p657 = pneg %p177
        $region62: #{tpu_custom_call.1} parent=59 // pred_check_branch
          %659 = sbr.rel (%p657) target = $region64
        $region63: #{tpu_custom_call.1} parent=59 // pred_region
          %s660 = sand.u32 %s162, 1
          %s661 = scalar_lea.sflag [#allocation4], %s660
          %s662 = sand.u32 %s162, 1
          %s663 = smul.addr %s662, 8
          %s664 = scalar_lea.vmem [#allocation7], %s663
          %665 = dma.done %s661, 128
        $region64: #{tpu_custom_call.1} parent=59 // pred_fallthru
          _
      $region60: #{tpu_custom_call.1} parent=5 // pred_fallthru
        _
    $region6: #{tpu_custom_call.1} parent=1 // loop_footer
      %s21 = sadd.s32 1, %s17
    $region7: #{tpu_custom_call.1} parent=1 // loop_footer_branch
      %16 = sbr.rel target = $region3
    $region8: #{tpu_custom_call.1} parent=1 // loop_exit
      _
    %666 = vsyncpa [#allocation3], 1
    %s667 = scalar_lea.sflag [#allocation3], 1
    %668 = vsyncpa %s667, 1
    %669 = vsyncpa [#allocation6], 1
    %670 = vsyncpa [#allocation4], 1
    %s671 = scalar_lea.sflag [#allocation4], 1
    %672 = vsyncpa %s671, 1

</llo_original>
